<compile_context>
chip_gen: v6e
topology: v6e:2x2x1
jax: 0.10.0
libtpu: 0.0.40
codegen_flags: <defaults>
</compile_context>

<pallas_src>
import functools
import math

import jax
import jax.numpy as jnp
from jax import lax
from jax.experimental import pallas as pl
from jax.experimental.pallas import tpu as pltpu

LANES = 128
SUBLANES = 8
CHUNK = SUBLANES * LANES            # 1024 elements per (8, 128) vreg-shaped chunk
SUB = 8                             # chunks per inner-loop step (8 vregs / stream)
MASK_TILE_BYTES_MAX = 4 * 1024 * 1024
VMEM_LIMIT_BYTES = 32 * 1024 * 1024


def _cdiv(a, b):
    return -(-a // b)


def _round_up(a, b):
    return _cdiv(a, b) * b


def _lcm(a, b):
    return a * b // math.gcd(a, b)


def _device_config():
    """(num_tensorcores, per-stream-per-buffer tile byte budget).  Best effort."""
    kind = ""
    try:
        kind = jax.devices()[0].device_kind.lower()
    except Exception:
        pass
    # v5e / v6e are single-TensorCore chips; v4 / v5p / v7x have two per chip.
    single_tc = ("lite" in kind) or ("v5e" in kind) or ("v6" in kind)
    num_tc = 1 if single_tc else 2
    per_stream = 4 * 1024 * 1024 if "v6" in kind else 2 * 1024 * 1024
    return num_tc, per_stream


def _maskmse_kernel(est_ref, tgt_ref, m_ref, out_ref, *, tile_chunks,
                    tiles_per_split, valid_chunks, needs_tail_mask):
    i = pl.program_id(1)

    @pl.when(i == 0)
    def _init():
        out_ref[...] = jnp.zeros_like(out_ref)

    start_chunk = (pl.program_id(0) * tiles_per_split + i) * tile_chunks
    n_steps = tile_chunks // SUB

    def body(j, acc):
        off = pl.multiple_of(j * SUB, SUB)
        sl = pl.ds(off, SUB)
        e = est_ref[sl].astype(jnp.float32)
        t = tgt_ref[sl].astype(jnp.float32)
        m = m_ref[sl].astype(jnp.float32)
        d = (e - t) * m                       # == est*m - tgt*m (one fewer vmul)
        sq = d * d
        if needs_tail_mask:
            # Zero out chunks that lie beyond the real data (partial last tile
            # or phantom tiles from the per-core split).  Garbage (even NaN) in
            # the padded region is never selected.
            cid = (start_chunk + off
                   + lax.broadcasted_iota(jnp.int32, (SUB, 1, 1), 0))
            sq = jnp.where(cid < valid_chunks, sq, 0.0)
        return acc + jnp.sum(sq, axis=0, keepdims=True)

    acc = lax.fori_loop(0, n_steps, body,
                        jnp.zeros((1, SUBLANES, LANES), jnp.float32),
                        unroll=min(2, n_steps))
    out_ref[...] += acc


def mask_mse(est_targets, targets, mask, *, n_split=None,
             per_stream_tile_bytes=None):
    """Pallas implementation of MaskMSE.forward -> scalar float32."""
    est_targets = jnp.asarray(est_targets)
    targets = jnp.asarray(targets)
    mask = jnp.asarray(mask)
    assert est_targets.shape == targets.shape

    full_shape = tuple(jnp.broadcast_shapes(est_targets.shape, mask.shape))
    if full_shape != tuple(est_targets.shape):        # rare edge case
        est_targets = jnp.broadcast_to(est_targets, full_shape)
        targets = jnp.broadcast_to(targets, full_shape)
    n_elems = math.prod(full_shape)
    assert n_elems > 0

    total_chunks = _cdiv(n_elems, CHUNK)
    num_tc, dev_stream_bytes = _device_config()
    per_stream = dev_stream_bytes if per_stream_tile_bytes is None else int(per_stream_tile_bytes)

    # ---- mask analysis: resident single VMEM tile vs streamed ---------------
    msk_shape = tuple(mask.shape)
    while msk_shape and msk_shape[0] == 1:
        msk_shape = msk_shape[1:]
    period = math.prod(msk_shape) if msk_shape else 1
    trailing = (len(msk_shape) <= len(full_shape) and
                full_shape[len(full_shape) - len(msk_shape):] == msk_shape)

    resident = False
    base = SUB
    if trailing:
        mask_tile_chunks = _lcm(period, CHUNK) // CHUNK
        cand = _lcm(mask_tile_chunks, SUB)
        if (cand * CHUNK * 4 <= MASK_TILE_BYTES_MAX            # fits VMEM budget
                and cand <= _round_up(total_chunks, SUB)):     # not bigger than input
            resident = True
            base = cand

    # ---- tile sizing (double-buffered, per-stream budget) -------------------
    item = max(est_targets.dtype.itemsize, targets.dtype.itemsize)
    target_chunks = max(SUB, per_stream // (CHUNK * item))
    tile_chunks = base * max(1, target_chunks // base)
    tile_chunks = min(tile_chunks, _round_up(total_chunks, base))

    if tile_chunks >= total_chunks:
        # Tiny input: pad it out to exactly one tile.  Padded zeros contribute
        # 0 to the sum; the mean still divides by the true n_elems.
        padded_chunks = tile_chunks
        tiles = 1
    else:
        # Large input: pad only to the next 1024-element boundary (needed for
        # the free (chunks, 8, 128) reshape); grid tail is masked in-kernel.
        padded_chunks = total_chunks
        tiles = _cdiv(total_chunks, tile_chunks)

    n_split = num_tc if n_split is None else int(n_split)
    n_split = max(1, min(n_split, tiles))
    tiles_per_split = _cdiv(tiles, n_split)
    needs_tail_mask = (tiles * tile_chunks != padded_chunks or
                       n_split * tiles_per_split != tiles)

    padded_len = padded_chunks * CHUNK

    def to_slab(x):
        x = x.reshape(-1)
        if x.size != padded_len:
            x = jnp.pad(x, (0, padded_len - x.size))
        return x.reshape(padded_chunks, SUBLANES, LANES)

    est3d = to_slab(est_targets)          # native dtype, cast to f32 in-kernel
    tgt3d = to_slab(targets)

    last_block = tiles - 1
    data_map = lambda c, i: (jnp.minimum(c * tiles_per_split + i, last_block), 0, 0)
    data_spec = pl.BlockSpec((tile_chunks, SUBLANES, LANES), data_map)

    if resident:
        tile_elems = tile_chunks * CHUNK
        m_flat = mask.reshape(-1).astype(jnp.float32)
        m_op = jnp.tile(m_flat, tile_elems // period).reshape(
            tile_chunks, SUBLANES, LANES)
        # Whole mask tile lives untiled in VMEM: DMA'd once, single buffer.
        m_spec = pl.BlockSpec(memory_space=pltpu.MemorySpace.VMEM)
        mask_bytes = tile_elems * 4
    else:
        # Fallback: stream the broadcast mask in its native dtype.
        m_op = to_slab(jnp.broadcast_to(mask, full_shape))
        m_spec = pl.BlockSpec((tile_chunks, SUBLANES, LANES), data_map)
        mask_bytes = n_elems * mask.dtype.itemsize

    kernel = functools.partial(
        _maskmse_kernel,
        tile_chunks=tile_chunks,
        tiles_per_split=tiles_per_split,
        valid_chunks=padded_chunks,
        needs_tail_mask=needs_tail_mask)

    cost = pl.CostEstimate(
        flops=4 * n_elems,
        transcendentals=0,
        bytes_accessed=(n_elems * est_targets.dtype.itemsize
                        + n_elems * targets.dtype.itemsize
                        + mask_bytes + n_split * CHUNK * 4))

    out = pl.pallas_call(
        kernel,
        out_shape=jax.ShapeDtypeStruct((n_split, SUBLANES, LANES), jnp.float32),
        grid_spec=pltpu.PrefetchScalarGridSpec(
            num_scalar_prefetch=0,
            grid=(n_split, tiles_per_split),
            in_specs=[data_spec, data_spec, m_spec],
            out_specs=pl.BlockSpec((1, SUBLANES, LANES), lambda c, i: (c, 0, 0)),
        ),
        compiler_params=pltpu.CompilerParams(
            dimension_semantics=("parallel", "arbitrary"),
            vmem_limit_bytes=VMEM_LIMIT_BYTES),
        cost_estimate=cost,
    )(est3d, tgt3d, m_op)

    # Tiny XLA epilogue: cross-lane / cross-core reduce + 100000 / N scaling.
    return (100000.0 / float(n_elems)) * jnp.sum(out)


def _reference(est, tgt, mask):
    m = jnp.broadcast_to(mask, jnp.broadcast_shapes(est.shape, mask.shape))
    return 100000.0 * jnp.mean((est * m - tgt * m) ** 2)


if __name__ == "__main__":
    key = jax.random.PRNGKey(0)
    k_est, k_tgt, k_mask, k2, k3 = jax.random.split(key, 5)

    # --- main case: (B, C, H, W) with a spatial mask broadcast over B, C -----
    B, C, H, W = 2, 4, 16, 16
    est = jax.random.normal(k_est, (B, C, H, W), dtype=jnp.float32)
    tgt = jax.random.normal(k_tgt, (B, C, H, W), dtype=jnp.float32)
    mask = (jax.random.uniform(k_mask, (H, W)) > 0.5).astype(jnp.float32)

    loss = jax.block_until_ready(mask_mse(est, tgt, mask))
    ref = _reference(est, tgt, mask)
    assert jnp.allclose(loss, ref, rtol=1e-4, atol=1e-3), (loss, ref)

    # --- non-1024-aligned element count + non-trailing mask (streamed path) --
    e2 = jax.random.normal(k2, (3, 5, 7, 11), dtype=jnp.float32)
    t2 = jax.random.normal(k3, (3, 5, 7, 11), dtype=jnp.float32)
    m2 = (jax.random.uniform(k_mask, (5, 1, 11)) > 0.3).astype(jnp.float32)
    l2 = jax.block_until_ready(mask_mse(e2, t2, m2))
    r2 = _reference(e2, t2, m2)
    assert jnp.allclose(l2, r2, rtol=1e-4, atol=1e-3), (l2, r2)

    # --- multi-tile with a partial last tile (in-kernel tail masking) --------
    e3 = jax.random.normal(k2, (3, 5, 2, 512), dtype=jnp.float32)
    t3 = jax.random.normal(k3, (3, 5, 2, 512), dtype=jnp.float32)
    m3 = (jax.random.uniform(k_mask, (2, 512)) > 0.5).astype(jnp.float32)
    l3 = jax.block_until_ready(
        mask_mse(e3, t3, m3, per_stream_tile_bytes=32 * 1024))
    r3 = _reference(e3, t3, m3)
    assert jnp.allclose(l3, r3, rtol=1e-4, atol=1e-3), (l3, r3)

    print("KERNEL_OK")
</pallas_src>

<mosaic_0001>
module attributes {stable_mosaic.version = 11 : i64} {
  func.func @_maskmse_kernel(%arg0: i32, %arg1: i32, %arg2: memref<8x8x128xf32, #tpu.memory_space<vmem>>, %arg3: memref<8x8x128xf32, #tpu.memory_space<vmem>>, %arg4: memref<8x8x128xf32, #tpu.memory_space<vmem>>, %arg5: memref<1x8x128xf32, #tpu.memory_space<vmem>>) attributes {dimension_semantics = [#tpu.dimension_semantics<parallel>, #tpu.dimension_semantics<arbitrary>], iteration_bounds = array<i64: 1, 1>, scalar_prefetch = 0 : i64, scratch_operands = 0 : i64, tpu.core_type = #tpu.core_type<tc>, window_params = [{transform_indices = @transform_0, window_bounds = array<i64: 8, 8, 128>}, {transform_indices = @transform_1, window_bounds = array<i64: 8, 8, 128>}, {pipeline_mode = #tpu.pipeline_mode<synchronous>, transform_indices = @transform_2, window_bounds = array<i64: 8, 8, 128>}, {transform_indices = @transform_3, window_bounds = array<i64: 1, 8, 128>}]} {
    %c0_i32 = arith.constant 0 : i32
    %0 = arith.cmpi eq, %arg1, %c0_i32 : i32
    %1 = arith.extui %0 : i1 to i32
    %c0_i32_0 = arith.constant 0 : i32
    %2 = arith.cmpi ne, %1, %c0_i32_0 : i32
    scf.if %2 {
      %cst_14 = arith.constant 0.000000e+00 : f32
      %21 = vector.broadcast %cst_14 : f32 to vector<1x8x128xf32>
      %c0_15 = arith.constant 0 : index
      %c0_16 = arith.constant 0 : index
      %c0_17 = arith.constant 0 : index
      %22 = vector.load %arg5[%c0_15, %c0_16, %c0_17] : memref<1x8x128xf32, #tpu.memory_space<vmem>>, vector<1x8x128xf32>
      tpu.vector_store %arg5[%c0_15, %c0_16, %c0_17], %21 {strides = array<i32>} : memref<1x8x128xf32, #tpu.memory_space<vmem>>, vector<1x8x128xf32>,
    } else {
    }
    %cst = arith.constant 0.000000e+00 : f32
    %3 = vector.broadcast %cst : f32 to vector<1x8x128xf32>
    %c0_i32_1 = arith.constant 0 : i32
    %c8_i32 = arith.constant 8 : i32
    %4 = arith.muli %c0_i32_1, %c8_i32 : i32
    %5 = tpu.assume_multiple %4, 8 : i32
    %6 = arith.index_cast %5 : i32 to index
    %c0 = arith.constant 0 : index
    %c0_2 = arith.constant 0 : index
    %7 = vector.load %arg2[%6, %c0, %c0_2] : memref<8x8x128xf32, #tpu.memory_space<vmem>>, vector<8x8x128xf32>
    %8 = arith.index_cast %5 : i32 to index
    %c0_3 = arith.constant 0 : index
    %c0_4 = arith.constant 0 : index
    %9 = vector.load %arg3[%8, %c0_3, %c0_4] : memref<8x8x128xf32, #tpu.memory_space<vmem>>, vector<8x8x128xf32>
    %10 = arith.index_cast %5 : i32 to index
    %c0_5 = arith.constant 0 : index
    %c0_6 = arith.constant 0 : index
    %11 = vector.load %arg4[%10, %c0_5, %c0_6] : memref<8x8x128xf32, #tpu.memory_space<vmem>>, vector<8x8x128xf32>
    %12 = arith.subf %7, %9 : vector<8x8x128xf32>
    %13 = arith.mulf %12, %11 : vector<8x8x128xf32>
    %14 = arith.mulf %13, %13 : vector<8x8x128xf32>
    %cst_7 = arith.constant dense<0.000000e+00> : vector<8x128xf32>
    %15 = vector.multi_reduction <add>, %14, %cst_7 [0] : vector<8x8x128xf32> to vector<8x128xf32>
    %16 = vector.shape_cast %15 : vector<8x128xf32> to vector<1x8x128xf32>
    %17 = arith.addf %3, %16 : vector<1x8x128xf32>
    %c1_i32 = arith.constant 1 : i32
    %c0_8 = arith.constant 0 : index
    %c0_9 = arith.constant 0 : index
    %c0_10 = arith.constant 0 : index
    %18 = vector.load %arg5[%c0_8, %c0_9, %c0_10] : memref<1x8x128xf32, #tpu.memory_space<vmem>>, vector<1x8x128xf32>
    %19 = arith.addf %18, %17 : vector<1x8x128xf32>
    %c0_11 = arith.constant 0 : index
    %c0_12 = arith.constant 0 : index
    %c0_13 = arith.constant 0 : index
    %20 = vector.load %arg5[%c0_11, %c0_12, %c0_13] : memref<1x8x128xf32, #tpu.memory_space<vmem>>, vector<1x8x128xf32>
    tpu.vector_store %arg5[%c0_11, %c0_12, %c0_13], %19 {strides = array<i32>} : memref<1x8x128xf32, #tpu.memory_space<vmem>>, vector<1x8x128xf32>,
    return
  }
  func.func @transform_0(%arg0: i32, %arg1: i32) -> (i32, i32, i32) {
    %c1_i32 = arith.constant 1 : i32
    %0 = arith.muli %arg0, %c1_i32 : i32
    %1 = arith.addi %0, %arg1 : i32
    %c0_i32 = arith.constant 0 : i32
    %2 = arith.minsi %1, %c0_i32 : i32
    %c0_i32_0 = arith.constant 0 : i32
    %c0_i32_1 = arith.constant 0 : i32
    %c0_i32_2 = arith.constant 0 : i32
    return %2, %c0_i32_0, %c0_i32_1 : i32, i32, i32
  }
  func.func @transform_1(%arg0: i32, %arg1: i32) -> (i32, i32, i32) {
    %c1_i32 = arith.constant 1 : i32
    %0 = arith.muli %arg0, %c1_i32 : i32
    %1 = arith.addi %0, %arg1 : i32
    %c0_i32 = arith.constant 0 : i32
    %2 = arith.minsi %1, %c0_i32 : i32
    %c0_i32_0 = arith.constant 0 : i32
    %c0_i32_1 = arith.constant 0 : i32
    %c0_i32_2 = arith.constant 0 : i32
    return %2, %c0_i32_0, %c0_i32_1 : i32, i32, i32
  }
  func.func @transform_2(%arg0: i32, %arg1: i32) -> (i32, i32, i32) {
    %c0_i32 = arith.constant 0 : i32
    %c0_i32_0 = arith.constant 0 : i32
    %c0_i32_1 = arith.constant 0 : i32
    %c0_i32_2 = arith.constant 0 : i32
    return %c0_i32, %c0_i32_0, %c0_i32_1 : i32, i32, i32
  }
  func.func @transform_3(%arg0: i32, %arg1: i32) -> (i32, i32, i32) {
    %c0_i32 = arith.constant 0 : i32
    %c0_i32_0 = arith.constant 0 : i32
    %c0_i32_1 = arith.constant 0 : i32
    return %arg0, %c0_i32, %c0_i32_0 : i32, i32, i32
  }
}

</mosaic_0001>

<llo_original>
// kernel: tpu_custom_call.1
$region0: #{tpu_custom_call.1}
  #allocation0 [shape = 'u32[]', space=smem, size = 0x4, offset = 0x4, fixed_abs, tag = 'smem constant byte address 0x4 - core index']
  #allocation1 [shape = 'u32[144,128]{1,0:T(1,128)}', space=vmem, size = 0x12000, scoped, tag = 'internal scratch']
  %s0 = inlined_call_operand.hbm [shape: f32[8,8,128], index: 0, kind: input, shape index: {}]
  %s1 = inlined_call_operand.hbm [shape: f32[8,8,128], index: 1, kind: input, shape index: {}]
  %s2 = inlined_call_operand.hbm [shape: f32[8,8,128], index: 2, kind: input, shape index: {}]
  %s3 = inlined_call_operand.hbm [shape: f32[1,8,128], index: 3, kind: output, shape index: {}]
  %s4 = sld [smem:[#allocation0]]
  $region38: #{tpu_custom_call.1} parent=0
    _
  %s6 = ssub.s32 1, %s4
  %s7 = scalar_select 0, %s6, %s4
  $region1: #{tpu_custom_call.1} parent=0
    #allocation2 [shape = 'u8[32768]{0}', space=vmem, size = 0x8000, scoped, tag = 'input window, operand 0, single buffered']
    #allocation3 [shape = 's32[1]{0}', space=sflag, size = 0x4, scoped, tag = 'scoped memory for tpu_custom_call.1']
    #allocation4 [shape = 's32[1]{0}', space=sflag, size = 0x4, scoped, tag = 'scoped memory for tpu_custom_call.1']
    #allocation5 [shape = 'u8[32768]{0}', space=vmem, size = 0x8000, scoped, tag = 'input window, operand 1, single buffered']
    #allocation6 [shape = 's32[1]{0}', space=sflag, size = 0x4, scoped, tag = 'scoped memory for tpu_custom_call.1']
    #allocation7 [shape = 'u8[32768]{0}', space=vmem, size = 0x8000, scoped, tag = 'input window, operand 2, single buffered']
    #allocation8 [shape = 'u8[4096]{0}', space=vmem, size = 0x1000, scoped, tag = 'output window, operand 0, single buffered']
    %8 = vsyncpa [#allocation3], 0
    %9 = vsyncpa [#allocation6], 0
    %10 = vsyncpa [#allocation4], 0
    // Predicated region
    $region2: #{tpu_custom_call.1} parent=1 // pred_check
      _
    $region3: #{tpu_custom_call.1} parent=1 // pred_check_branch
      %12 = sbr.rel (0) target = $region5
    $region4: #{tpu_custom_call.1} parent=1 // pred_region
      %s13 = sadd.s32 0, 0
      %p14 = scmp.lt.s32.totalorder %s13, 0
      %s15 = scalar_select %p14, %s13, 0
      %s16 = smul.u32 8, %s15
      %s18 = ssub.s32 1024, 1024
      %19 = vsyncadd [#allocation3], %s18
      %s20 = smul.addr %s16, 128
      %s21 = scalar_lea.hbm %s0, %s20
      %s22 = sshll.u32 [#allocation2], 4
      %s23 = int_to_ptr.vmem [resolvable:$true] %s22
      %28 = dma.hbm_to_vmem [thread:$0]  %s21, 1024, %s23, [#allocation3], 128, 128, 8
    $region5: #{tpu_custom_call.1} parent=1 // pred_fallthru
      _
    // Predicated region
    $region6: #{tpu_custom_call.1} parent=1 // pred_check
      _
    $region7: #{tpu_custom_call.1} parent=1 // pred_check_branch
      %30 = sbr.rel (0) target = $region9
    $region8: #{tpu_custom_call.1} parent=1 // pred_region
      %s31 = sadd.s32 0, 0
      %p32 = scmp.lt.s32.totalorder %s31, 0
      %s33 = scalar_select %p32, %s31, 0
      %s34 = smul.u32 8, %s33
      %s36 = ssub.s32 1024, 1024
      %37 = vsyncadd [#allocation6], %s36
      %s38 = smul.addr %s34, 128
      %s39 = scalar_lea.hbm %s1, %s38
      %s40 = sshll.u32 [#allocation5], 4
      %s41 = int_to_ptr.vmem [resolvable:$true] %s40
      %46 = dma.hbm_to_vmem [thread:$0]  %s39, 1024, %s41, [#allocation6], 128, 128, 8
    $region9: #{tpu_custom_call.1} parent=1 // pred_fallthru
      _
    // Predicated region
    $region10: #{tpu_custom_call.1} parent=1 // pred_check
      _
    $region11: #{tpu_custom_call.1} parent=1 // pred_check_branch
      %48 = sbr.rel (0) target = $region13
    $region12: #{tpu_custom_call.1} parent=1 // pred_region
      %s50 = ssub.s32 1024, 1024
      %51 = vsyncadd [#allocation6], %s50
      %s52 = sshll.u32 [#allocation7], 4
      %s53 = int_to_ptr.vmem [resolvable:$true] %s52
      %58 = dma.hbm_to_vmem [thread:$0]  %s2, 1024, %s53, [#allocation6], 128, 128, 8
    $region13: #{tpu_custom_call.1} parent=1 // pred_fallthru
      _
    // Predicated region
    $region14: #{tpu_custom_call.1} parent=1 // pred_check
      _
    $region15: #{tpu_custom_call.1} parent=1 // pred_check_branch
      %60 = sbr.rel (0) target = $region17
    $region16: #{tpu_custom_call.1} parent=1 // pred_region
      %61 = dma.done [#allocation3], 1024
    $region17: #{tpu_custom_call.1} parent=1 // pred_fallthru
      _
    // Predicated region
    $region18: #{tpu_custom_call.1} parent=1 // pred_check
      _
    $region19: #{tpu_custom_call.1} parent=1 // pred_check_branch
      %63 = sbr.rel (0) target = $region21
    $region20: #{tpu_custom_call.1} parent=1 // pred_region
      %64 = dma.done [#allocation6], 1024
    $region21: #{tpu_custom_call.1} parent=1 // pred_fallthru
      _
    // Predicated region
    $region22: #{tpu_custom_call.1} parent=1 // pred_check
      _
    $region23: #{tpu_custom_call.1} parent=1 // pred_check_branch
      %66 = sbr.rel (0) target = $region25
    $region24: #{tpu_custom_call.1} parent=1 // pred_region
      %67 = dma.done [#allocation6], 1024
    $region25: #{tpu_custom_call.1} parent=1 // pred_fallthru
      _
    %s68 = sadd.s32 0, 0
    %p69 = scmp.lt.s32.totalorder %s68, 0
    %s70 = scalar_select %p69, %s68, 0
    %s71 = smul.u32 8, %s70
    %s72 = sadd.s32 0, 0
    %p73 = scmp.lt.s32.totalorder %s72, 0
    %s74 = scalar_select %p73, %s72, 0
    %s75 = smul.u32 8, %s74
    %p76 = scmp.eq.s32.totalorder 0, 0
    // Predicated region
    $region26: #{tpu_custom_call.1} parent=1 // pred_check
      %p77 = pneg %p76
    $region27: #{tpu_custom_call.1} parent=1 // pred_check_branch
      %79 = sbr.rel (%p77) target = $region29
    $region28: #{tpu_custom_call.1} parent=1 // pred_region
      %80 = vst [vmem:[#allocation8] sm:$0xff] 0.0
    $region29: #{tpu_custom_call.1} parent=1 // pred_fallthru
      _
    %s81 = smul.u32 0, 8
    %s82 = scalar_lea.vmem [#allocation2], %s81
    %v83 = vld [vmem:[%s82] sm:$0xff]
    %v84 = vld [vmem:[%s82 + $0x8] sm:$0xff]
    %v85 = vld [vmem:[%s82 + $0x10] sm:$0xff]
    %v86 = vld [vmem:[%s82 + $0x18] sm:$0xff]
    %v87 = vld [vmem:[%s82 + $0x20] sm:$0xff]
    %v88 = vld [vmem:[%s82 + $0x28] sm:$0xff]
    %v89 = vld [vmem:[%s82 + $0x30] sm:$0xff]
    %v90 = vld [vmem:[%s82 + $0x38] sm:$0xff]
    %s91 = scalar_lea.vmem [#allocation5], %s81
    %v92 = vld [vmem:[%s91] sm:$0xff]
    %v93 = vld [vmem:[%s91 + $0x8] sm:$0xff]
    %v94 = vld [vmem:[%s91 + $0x10] sm:$0xff]
    %v95 = vld [vmem:[%s91 + $0x18] sm:$0xff]
    %v96 = vld [vmem:[%s91 + $0x20] sm:$0xff]
    %v97 = vld [vmem:[%s91 + $0x28] sm:$0xff]
    %v98 = vld [vmem:[%s91 + $0x30] sm:$0xff]
    %v99 = vld [vmem:[%s91 + $0x38] sm:$0xff]
    %s100 = scalar_lea.vmem [#allocation7], %s81
    %v101 = vld [vmem:[%s100] sm:$0xff]
    %v102 = vld [vmem:[%s100 + $0x8] sm:$0xff]
    %v103 = vld [vmem:[%s100 + $0x10] sm:$0xff]
    %v104 = vld [vmem:[%s100 + $0x18] sm:$0xff]
    %v105 = vld [vmem:[%s100 + $0x20] sm:$0xff]
    %v106 = vld [vmem:[%s100 + $0x28] sm:$0xff]
    %v107 = vld [vmem:[%s100 + $0x30] sm:$0xff]
    %v108 = vld [vmem:[%s100 + $0x38] sm:$0xff]
    %v109 = vsub.f32 %v83, %v92
    %v110 = vsub.f32 %v84, %v93
    %v111 = vsub.f32 %v85, %v94
    %v112 = vsub.f32 %v86, %v95
    %v113 = vsub.f32 %v87, %v96
    %v114 = vsub.f32 %v88, %v97
    %v115 = vsub.f32 %v89, %v98
    %v116 = vsub.f32 %v90, %v99
    %v117 = vmul.f32 %v109, %v101
    %v118 = vmul.f32 %v110, %v102
    %v119 = vmul.f32 %v111, %v103
    %v120 = vmul.f32 %v112, %v104
    %v121 = vmul.f32 %v113, %v105
    %v122 = vmul.f32 %v114, %v106
    %v123 = vmul.f32 %v115, %v107
    %v124 = vmul.f32 %v116, %v108
    %v125 = vmul.f32 %v117, %v117
    %v126 = vmul.f32 %v118, %v118
    %v127 = vmul.f32 %v119, %v119
    %v128 = vmul.f32 %v120, %v120
    %v129 = vmul.f32 %v121, %v121
    %v130 = vmul.f32 %v122, %v122
    %v131 = vmul.f32 %v123, %v123
    %v132 = vmul.f32 %v124, %v124
    %v133 = vadd.f32 %v125, %v126
    %v134 = vadd.f32 %v133, %v127
    %v135 = vadd.f32 %v134, %v128
    %v136 = vadd.f32 %v135, %v129
    %v137 = vadd.f32 %v136, %v130
    %v138 = vadd.f32 %v137, %v131
    %v139 = vadd.f32 %v138, %v132
    %v140 = vadd.f32 %v139, 0.0
    %v141 = vld [vmem:[#allocation8] sm:$0xff]
    %v142 = vadd.f32 %v141, %v140
    %143 = vst [vmem:[#allocation8] sm:$0xff] %v142
    // Predicated region
    $region30: #{tpu_custom_call.1} parent=1 // pred_check
      _
    $region31: #{tpu_custom_call.1} parent=1 // pred_check_branch
      %145 = sbr.rel (0) target = $region33
    $region32: #{tpu_custom_call.1} parent=1 // pred_region
      %s147 = ssub.s32 128, 128
      %148 = vsyncadd [#allocation4], %s147
      %s150 = sshll.u32 [#allocation8], 4
      %s151 = int_to_ptr.vmem [resolvable:$true] %s150
      %153 = dma.vmem_to_hbm [thread:$0]  %s151, 128, %s3, [#allocation4]
    $region33: #{tpu_custom_call.1} parent=1 // pred_fallthru
      _
    // Predicated region
    $region34: #{tpu_custom_call.1} parent=1 // pred_check
      _
    $region35: #{tpu_custom_call.1} parent=1 // pred_check_branch
      %155 = sbr.rel (0) target = $region37
    $region36: #{tpu_custom_call.1} parent=1 // pred_region
      %156 = dma.done [#allocation4], 128
    $region37: #{tpu_custom_call.1} parent=1 // pred_fallthru
      _
    %157 = vsyncpa [#allocation3], 1
    %158 = vsyncpa [#allocation6], 1
    %159 = vsyncpa [#allocation4], 1

</llo_original>
